<compile_context>
chip_gen: v6e
topology: v6e:2x2x1
jax: 0.10.0
libtpu: 0.0.40
codegen_flags: <defaults>
</compile_context>

<pallas_src>
import jax
import jax.numpy as jnp
from jax.experimental import pallas as pl
from jax.experimental.pallas import tpu as pltpu


def sparse_embed_kernel(idx_ref, emb_t_ref, w_ref, b_ref, out_ref):
    idx = idx_ref[...]                          # (B, S) int32, VMEM
    B, S = idx.shape
    D, V = emb_t_ref.shape

    # Fused linear head: proj = W @ E^T  -> (1, V), lane-dense along the vocab axis.
    # M=1 matmul is tiny; MXU handles it once per call.
    proj = jnp.dot(w_ref[...], emb_t_ref[...],
                   preferred_element_type=jnp.float32)           # (1, V)

    # Integer one-hot counts: counts[b, v] = #{ s : idx[b, s] == v }.
    # S is small & static -> unrolled compare/accumulate sweeps on the VPU.
    vocab = jax.lax.broadcasted_iota(jnp.int32, (B, V), 1)
    counts = (idx[:, 0:1] == vocab).astype(jnp.int32)
    for s in range(1, S):
        counts = counts + (idx[:, s:s + 1] == vocab).astype(jnp.int32)

    # Weighted lane reduction over the vocab axis (XLU), then scale/bias on the
    # tiny (B, 1) result only.
    weighted = counts.astype(jnp.float32) * proj                 # (B, V), broadcast (1, V)
    pooled = jnp.sum(weighted, axis=1, keepdims=True)            # (B, 1)
    out = pooled * (1.0 / S) + b_ref[0, 0]                       # bias: scalar from SMEM
    out_ref[...] = out.astype(out_ref.dtype)


def sparse_embedding_model(x, emb_table, lin_w, lin_b):
    """x: (B, S) int32; emb_table: (V, D) f32; lin_w: (1, D) f32; lin_b: (1,) f32."""
    B, S = x.shape
    V, D = emb_table.shape

    emb_t = emb_table.T                     # (D, V) lane-dense layout for the kernel
    bias = lin_b.reshape(1, 1)              # scalar, lives in SMEM

    return pl.pallas_call(
        sparse_embed_kernel,
        out_shape=jax.ShapeDtypeStruct((B, 1), jnp.float32),
        grid_spec=pltpu.PrefetchScalarGridSpec(
            num_scalar_prefetch=0,
            grid=(1,),
            in_specs=[
                pl.BlockSpec((B, S), lambda i: (0, 0)),                 # indices
                pl.BlockSpec((D, V), lambda i: (0, 0)),                 # E^T (lane-dense)
                pl.BlockSpec((1, D), lambda i: (0, 0)),                 # linear weight
                pl.BlockSpec(memory_space=pltpu.MemorySpace.SMEM),      # bias scalar
            ],
            out_specs=pl.BlockSpec((B, 1), lambda i: (0, 0)),
        ),
        compiler_params=pltpu.CompilerParams(
            dimension_semantics=("arbitrary",)),
    )(x, emb_t, lin_w, bias)


if __name__ == "__main__":
    num_embeddings = 1000
    embedding_dim = 10
    batch_size = 32
    seq_len = 5

    key = jax.random.PRNGKey(0)
    k_idx, k_emb, k_w, k_b = jax.random.split(key, 4)

    # deterministic synthetic parameters matching the nn.Module shapes
    x = jax.random.randint(k_idx, (batch_size, seq_len), 0, num_embeddings,
                           dtype=jnp.int32)
    emb_table = jax.random.normal(k_emb, (num_embeddings, embedding_dim),
                                  dtype=jnp.float32)             # nn.Embedding.weight
    lin_w = jax.random.uniform(k_w, (1, embedding_dim), dtype=jnp.float32,
                               minval=-0.3, maxval=0.3)          # nn.Linear.weight (1, D)
    lin_b = jax.random.uniform(k_b, (1,), dtype=jnp.float32,
                               minval=-0.3, maxval=0.3)          # nn.Linear.bias

    out = sparse_embedding_model(x, emb_table, lin_w, lin_b)
    out = jax.block_until_ready(out)

    # pure-JAX reference of the PyTorch forward
    ref = emb_table[x].mean(axis=1) @ lin_w.T + lin_b            # (B, 1)
    assert out.shape == (batch_size, 1)
    assert jnp.allclose(out, ref, atol=1e-5, rtol=1e-5)

    print("KERNEL_OK")
</pallas_src>

<mosaic_0001>
module attributes {stable_mosaic.version = 11 : i64} {
  func.func @sparse_embed_kernel(%arg0: i32, %arg1: memref<32x5xi32, #tpu.memory_space<vmem>>, %arg2: memref<10x1000xf32, #tpu.memory_space<vmem>>, %arg3: memref<1x10xf32, #tpu.memory_space<vmem>>, %arg4: memref<1x1xf32, #tpu.memory_space<smem>>, %arg5: memref<32x1xf32, #tpu.memory_space<vmem>>) attributes {dimension_semantics = [#tpu.dimension_semantics<arbitrary>], iteration_bounds = array<i64: 1>, scalar_prefetch = 0 : i64, scratch_operands = 0 : i64, tpu.core_type = #tpu.core_type<tc>, window_params = [{pipeline_mode = #tpu.pipeline_mode<synchronous>, transform_indices = @transform_0, window_bounds = array<i64: 32, 5>}, {pipeline_mode = #tpu.pipeline_mode<synchronous>, transform_indices = @transform_1, window_bounds = array<i64: 10, 1000>}, {pipeline_mode = #tpu.pipeline_mode<synchronous>, transform_indices = @transform_2, window_bounds = array<i64: 1, 10>}, {transform_indices = @transform_3, window_bounds = array<i64: 1, 1>}, {pipeline_mode = #tpu.pipeline_mode<synchronous>, transform_indices = @transform_4, window_bounds = array<i64: 32, 1>}]} {
    %c0 = arith.constant 0 : index
    %c0_0 = arith.constant 0 : index
    %0 = vector.load %arg1[%c0, %c0_0] : memref<32x5xi32, #tpu.memory_space<vmem>>, vector<32x5xi32>
    %c0_1 = arith.constant 0 : index
    %c0_2 = arith.constant 0 : index
    %1 = vector.load %arg3[%c0_1, %c0_2] : memref<1x10xf32, #tpu.memory_space<vmem>>, vector<1x10xf32>
    %c0_3 = arith.constant 0 : index
    %c0_4 = arith.constant 0 : index
    %2 = vector.load %arg2[%c0_3, %c0_4] : memref<10x1000xf32, #tpu.memory_space<vmem>>, vector<10x1000xf32>
    %cst = arith.constant dense<0.000000e+00> : vector<1x1000xf32>
    %3 = tpu.matmul %1, %2, %cst {dimension_numbers = #tpu.dot_dimension_numbers<[1], [0], [0], [1], [0, 0, 1, 1], [], []>} : vector<1x10xf32>, vector<10x1000xf32>, vector<1x1000xf32> -> vector<1x1000xf32>
    %4 = tpu.iota {dimensions = array<i32: 1>} : vector<32x1000xi32>
    %5 = vector.extract_strided_slice %0 {offsets = [0, 0], sizes = [32, 1], strides = [1, 1]} : vector<32x5xi32> to vector<32x1xi32>
    %6 = vector.broadcast %5 : vector<32x1xi32> to vector<32x1000xi32>
    %7 = arith.cmpi eq, %6, %4 : vector<32x1000xi32>
    %8 = arith.extui %7 : vector<32x1000xi1> to vector<32x1000xi32>
    %9 = vector.extract_strided_slice %0 {offsets = [0, 1], sizes = [32, 1], strides = [1, 1]} : vector<32x5xi32> to vector<32x1xi32>
    %10 = vector.broadcast %9 : vector<32x1xi32> to vector<32x1000xi32>
    %11 = arith.cmpi eq, %10, %4 : vector<32x1000xi32>
    %12 = arith.extui %11 : vector<32x1000xi1> to vector<32x1000xi32>
    %13 = arith.addi %8, %12 : vector<32x1000xi32>
    %14 = vector.extract_strided_slice %0 {offsets = [0, 2], sizes = [32, 1], strides = [1, 1]} : vector<32x5xi32> to vector<32x1xi32>
    %15 = vector.broadcast %14 : vector<32x1xi32> to vector<32x1000xi32>
    %16 = arith.cmpi eq, %15, %4 : vector<32x1000xi32>
    %17 = arith.extui %16 : vector<32x1000xi1> to vector<32x1000xi32>
    %18 = arith.addi %13, %17 : vector<32x1000xi32>
    %19 = vector.extract_strided_slice %0 {offsets = [0, 3], sizes = [32, 1], strides = [1, 1]} : vector<32x5xi32> to vector<32x1xi32>
    %20 = vector.broadcast %19 : vector<32x1xi32> to vector<32x1000xi32>
    %21 = arith.cmpi eq, %20, %4 : vector<32x1000xi32>
    %22 = arith.extui %21 : vector<32x1000xi1> to vector<32x1000xi32>
    %23 = arith.addi %18, %22 : vector<32x1000xi32>
    %24 = vector.extract_strided_slice %0 {offsets = [0, 4], sizes = [32, 1], strides = [1, 1]} : vector<32x5xi32> to vector<32x1xi32>
    %25 = vector.broadcast %24 : vector<32x1xi32> to vector<32x1000xi32>
    %26 = arith.cmpi eq, %25, %4 : vector<32x1000xi32>
    %27 = arith.extui %26 : vector<32x1000xi1> to vector<32x1000xi32>
    %28 = arith.addi %23, %27 : vector<32x1000xi32>
    %29 = arith.sitofp %28 : vector<32x1000xi32> to vector<32x1000xf32>
    %30 = vector.broadcast %3 : vector<1x1000xf32> to vector<32x1000xf32>
    %31 = arith.mulf %29, %30 : vector<32x1000xf32>
    %cst_5 = arith.constant dense<0.000000e+00> : vector<32xf32>
    %32 = vector.multi_reduction <add>, %31, %cst_5 [1] : vector<32x1000xf32> to vector<32xf32>
    %33 = vector.shape_cast %32 : vector<32xf32> to vector<32x1xf32>
    %cst_6 = arith.constant 2.000000e-01 : f32
    %34 = vector.broadcast %cst_6 : f32 to vector<32x1xf32>
    %35 = arith.mulf %33, %34 : vector<32x1xf32>
    %c0_7 = arith.constant 0 : index
    %c0_8 = arith.constant 0 : index
    %36 = memref.load %arg4[%c0_7, %c0_8] : memref<1x1xf32, #tpu.memory_space<smem>>
    %37 = vector.broadcast %36 : f32 to vector<32x1xf32>
    %38 = arith.addf %35, %37 : vector<32x1xf32>
    %c0_9 = arith.constant 0 : index
    %c0_10 = arith.constant 0 : index
    %39 = vector.load %arg5[%c0_9, %c0_10] : memref<32x1xf32, #tpu.memory_space<vmem>>, vector<32x1xf32>
    tpu.vector_store %arg5[%c0_9, %c0_10], %38 {strides = array<i32>} : memref<32x1xf32, #tpu.memory_space<vmem>>, vector<32x1xf32>,
    return
  }
  func.func @transform_0(%arg0: i32) -> (i32, i32) {
    %c0_i32 = arith.constant 0 : i32
    %c0_i32_0 = arith.constant 0 : i32
    %c0_i32_1 = arith.constant 0 : i32
    return %c0_i32, %c0_i32_0 : i32, i32
  }
  func.func @transform_1(%arg0: i32) -> (i32, i32) {
    %c0_i32 = arith.constant 0 : i32
    %c0_i32_0 = arith.constant 0 : i32
    %c0_i32_1 = arith.constant 0 : i32
    return %c0_i32, %c0_i32_0 : i32, i32
  }
  func.func @transform_2(%arg0: i32) -> (i32, i32) {
    %c0_i32 = arith.constant 0 : i32
    %c0_i32_0 = arith.constant 0 : i32
    %c0_i32_1 = arith.constant 0 : i32
    return %c0_i32, %c0_i32_0 : i32, i32
  }
  func.func @transform_3(%arg0: i32) -> (i32, i32) {
    %c0_i32 = arith.constant 0 : i32
    %c0_i32_0 = arith.constant 0 : i32
    %c0_i32_1 = arith.constant 0 : i32
    return %c0_i32, %c0_i32_0 : i32, i32
  }
  func.func @transform_4(%arg0: i32) -> (i32, i32) {
    %c0_i32 = arith.constant 0 : i32
    %c0_i32_0 = arith.constant 0 : i32
    %c0_i32_1 = arith.constant 0 : i32
    return %c0_i32, %c0_i32_0 : i32, i32
  }
}

</mosaic_0001>

<llo_original>
// kernel: tpu_custom_call.1
$region0: #{tpu_custom_call.1}
  #allocation0 [shape = 'u32[]', space=smem, size = 0x4, offset = 0x4, fixed_abs, tag = 'smem constant byte address 0x4 - core index']
  #allocation1 [shape = 'u32[144,128]{1,0:T(1,128)}', space=vmem, size = 0x12000, scoped, tag = 'internal scratch']
  #allocation2 [shape = 'f32[1,1]{1,0:T(1,128)S(6)}', space=smem, size = 0x200, scoped, tag = 'scoped memory for tpu_custom_call.1']
  %s0 = inlined_call_operand.vmem [shape: s32[32,5], index: 0, kind: input, shape index: {}]
  %s1 = inlined_call_operand.hbm [shape: f32[10,1000], index: 1, kind: input, shape index: {}]
  %s2 = inlined_call_operand.vmem [shape: f32[1,10], index: 2, kind: input, shape index: {}]
  %s3 = inlined_call_operand.<no memory space> [shape: f32[1,1], index: 3, kind: input, shape index: {}]
  %s4 = inlined_call_operand.vmem [shape: f32[32,1], index: 4, kind: output, shape index: {}]
  %s5 = sld [smem:[#allocation0]]
  $region30: #{tpu_custom_call.1} parent=0
    _
  %s7 = ssub.s32 1, %s5
  %s8 = scalar_select 0, %s7, %s5
  %9 = sst [smem:[#allocation2]] %s3
  $region1: #{tpu_custom_call.1} parent=0
    #allocation3 [shape = 'u8[65536]{0}', space=vmem, size = 0x10000, scoped, tag = 'input window, operand 1, single buffered']
    #allocation4 [shape = 's32[1]{0}', space=sflag, size = 0x4, scoped, tag = 'scoped memory for tpu_custom_call.1']
    %10 = vsyncpa [#allocation4], 0
    // Predicated region
    $region2: #{tpu_custom_call.1} parent=1 // pred_check
      _
    $region3: #{tpu_custom_call.1} parent=1 // pred_check_branch
      %12 = sbr.rel (0) target = $region5
    $region4: #{tpu_custom_call.1} parent=1 // pred_region
      _
    $region5: #{tpu_custom_call.1} parent=1 // pred_fallthru
      _
    // Predicated region
    $region6: #{tpu_custom_call.1} parent=1 // pred_check
      _
    $region7: #{tpu_custom_call.1} parent=1 // pred_check_branch
      %14 = sbr.rel (0) target = $region9
    $region8: #{tpu_custom_call.1} parent=1 // pred_region
      %s16 = ssub.s32 2048, 2048
      %17 = vsyncadd [#allocation4], %s16
      %s18 = sshll.u32 [#allocation3], 4
      %s19 = int_to_ptr.vmem [resolvable:$true] %s18
      %24 = dma.hbm_to_vmem [thread:$0]  %s1, 2048, %s19, [#allocation4], 1024, 1024, 64
    $region9: #{tpu_custom_call.1} parent=1 // pred_fallthru
      _
    // Predicated region
    $region10: #{tpu_custom_call.1} parent=1 // pred_check
      _
    $region11: #{tpu_custom_call.1} parent=1 // pred_check_branch
      %26 = sbr.rel (0) target = $region13
    $region12: #{tpu_custom_call.1} parent=1 // pred_region
      _
    $region13: #{tpu_custom_call.1} parent=1 // pred_fallthru
      _
    // Predicated region
    $region14: #{tpu_custom_call.1} parent=1 // pred_check
      _
    $region15: #{tpu_custom_call.1} parent=1 // pred_check_branch
      %28 = sbr.rel (0) target = $region17
    $region16: #{tpu_custom_call.1} parent=1 // pred_region
      _
    $region17: #{tpu_custom_call.1} parent=1 // pred_fallthru
      _
    // Predicated region
    $region18: #{tpu_custom_call.1} parent=1 // pred_check
      _
    $region19: #{tpu_custom_call.1} parent=1 // pred_check_branch
      %30 = sbr.rel (0) target = $region21
    $region20: #{tpu_custom_call.1} parent=1 // pred_region
      %31 = dma.done [#allocation4], 2048
    $region21: #{tpu_custom_call.1} parent=1 // pred_fallthru
      _
    %v32 = vld [vmem:[%s0] sm:$0xff]
    %v33 = vld [vmem:[%s0 + $0x8] sm:$0xff]
    %v34 = vld [vmem:[%s0 + $0x10] sm:$0xff]
    %v35 = vld [vmem:[%s0 + $0x18] sm:$0xff]
    %v36 = vld [vmem:[%s2] sm:$0x1]
    %v37 = vld [vmem:[#allocation3] sm:$0xff]
    %v38 = vld [vmem:[#allocation3 + $0x8] sm:$0xff]
    %v39 = vld [vmem:[#allocation3 + $0x10] sm:$0xff]
    %v40 = vld [vmem:[#allocation3 + $0x18] sm:$0xff]
    %v41 = vld [vmem:[#allocation3 + $0x20] sm:$0xff]
    %v42 = vld [vmem:[#allocation3 + $0x28] sm:$0xff]
    %v43 = vld [vmem:[#allocation3 + $0x30] sm:$0xff]
    %v44 = vld [vmem:[#allocation3 + $0x38] sm:$0xff]
    %v45 = vld [vmem:[#allocation3 + $0x40] sm:$0x3]
    %v46 = vld [vmem:[#allocation3 + $0x48] sm:$0x3]
    %v47 = vld [vmem:[#allocation3 + $0x50] sm:$0x3]
    %v48 = vld [vmem:[#allocation3 + $0x58] sm:$0x3]
    %v49 = vld [vmem:[#allocation3 + $0x60] sm:$0x3]
    %v50 = vld [vmem:[#allocation3 + $0x68] sm:$0x3]
    %v51 = vld [vmem:[#allocation3 + $0x70] sm:$0x3]
    %v52 = vld [vmem:[#allocation3 + $0x78] sm:$0x3]
    %vm53 = vcmask 80896
    %v55 = vsel %vm53, %v36, 0
    %vm57 = vcmask 1041408
    %v59 = vsel %vm57, %v45, 0
    %v62 = vsel %vm57, %v46, 0
    %v65 = vsel %vm57, %v47, 0
    %v68 = vsel %vm57, %v48, 0
    %v71 = vsel %vm57, %v49, 0
    %v74 = vsel %vm57, %v50, 0
    %v77 = vsel %vm57, %v51, 0
    %v80 = vsel %vm57, %v52, 0
    %82 = vmatprep.subr.mxu0 0.0
    %83 = vmatpush1.msra.mxu0 0.0
    %84 = vmatprep.subr.mxu0 0.0
    %85 = vmatpush1.msra.mxu0 0.0
    %86 = vmatprep.subr.mxu0 0.0
    %87 = vmatpush1.msra.mxu0 0.0
    %88 = vmatprep.subr.mxu0 0.0
    %89 = vmatpush1.msra.mxu0 0.0
    %90 = vmatprep.subr.mxu0 0.0
    %91 = vmatpush1.msra.mxu0 0.0
    %92 = vmatprep.subr.mxu0 0.0
    %93 = vmatpush1.msra.mxu0 0.0
    %94 = vmatprep.subr.mxu0 0.0
    %95 = vmatpush1.msra.mxu0 0.0
    %96 = vmatprep.subr.mxu0 0.0
    %97 = vmatpush1.msra.mxu0 0.0
    %98 = vmatprep.subr.mxu0 0.0
    %99 = vmatpush1.msra.mxu0 0.0
    %100 = vmatprep.subr.mxu0 0.0
    %101 = vmatpush1.msra.mxu0 0.0
    %102 = vmatprep.subr.mxu0 0.0
    %103 = vmatpush1.msra.mxu0 0.0
    %104 = vmatprep.subr.mxu0 0.0
    %105 = vmatpush1.msra.mxu0 0.0
    %106 = vmatprep.subr.mxu0 0.0
    %107 = vmatpush1.msra.mxu0 0.0
    %108 = vmatprep.subr.mxu0 0.0
    %109 = vmatpush1.msra.mxu0 0.0
    %110 = vmatprep.subr.mxu0 %v62
    %111 = vmatpush1.msra.mxu0 %v59
    %112 = vmatprep.subr.mxu0 %v38
    %113 = vmatpush1.msra.mxu0 %v37
    %114 = vmatprep.subr.mxu0 0.0
    %115 = vmatpush2.msra.mxu0 0.0
    %116 = vmatprep.subr.mxu0 0.0
    %117 = vmatpush2.msra.mxu0 0.0
    %118 = vmatprep.subr.mxu0 0.0
    %119 = vmatpush2.msra.mxu0 0.0
    %120 = vmatprep.subr.mxu0 0.0
    %121 = vmatpush2.msra.mxu0 0.0
    %122 = vmatprep.subr.mxu0 0.0
    %123 = vmatpush2.msra.mxu0 0.0
    %124 = vmatprep.subr.mxu0 0.0
    %125 = vmatpush2.msra.mxu0 0.0
    %126 = vmatprep.subr.mxu0 0.0
    %127 = vmatpush2.msra.mxu0 0.0
    %128 = vmatprep.subr.mxu0 0.0
    %129 = vmatpush2.msra.mxu0 0.0
    %130 = vmatprep.subr.mxu0 0.0
    %131 = vmatpush2.msra.mxu0 0.0
    %132 = vmatprep.subr.mxu0 0.0
    %133 = vmatpush2.msra.mxu0 0.0
    %134 = vmatprep.subr.mxu0 0.0
    %135 = vmatpush2.msra.mxu0 0.0
    %136 = vmatprep.subr.mxu0 0.0
    %137 = vmatpush2.msra.mxu0 0.0
    %138 = vmatprep.subr.mxu0 0.0
    %139 = vmatpush2.msra.mxu0 0.0
    %140 = vmatprep.subr.mxu0 0.0
    %141 = vmatpush2.msra.mxu0 0.0
    %142 = vmatprep.subr.mxu0 0.0
    %143 = vmatpush2.msra.mxu0 0.0
    %144 = vmatprep.subr.mxu0 0.0
    %145 = vmatpush2.msra.mxu0 0.0
    %146 = vmatprep.mubr.f32.mxu0 0.0
    %147 = vmatmul.mubr.f32.gmra.mxu0 %v55
    %v148 = vpop.f32.mrf.mxu0
    %v149 = vadd.f32 0.0, %v148
    %v150 = vpop.f32.mrf.mxu0
    %v151 = vadd.f32 0.0, %v150
    %152 = vdwg.mxu0
    %153 = vmatprep.subr.mxu0 0.0
    %154 = vmatpush1.msra.mxu0 0.0
    %155 = vmatprep.subr.mxu0 0.0
    %156 = vmatpush1.msra.mxu0 0.0
    %157 = vmatprep.subr.mxu0 0.0
    %158 = vmatpush1.msra.mxu0 0.0
    %159 = vmatprep.subr.mxu0 0.0
    %160 = vmatpush1.msra.mxu0 0.0
    %161 = vmatprep.subr.mxu0 0.0
    %162 = vmatpush1.msra.mxu0 0.0
    %163 = vmatprep.subr.mxu0 0.0
    %164 = vmatpush1.msra.mxu0 0.0
    %165 = vmatprep.subr.mxu0 0.0
    %166 = vmatpush1.msra.mxu0 0.0
    %167 = vmatprep.subr.mxu0 0.0
    %168 = vmatpush1.msra.mxu0 0.0
    %169 = vmatprep.subr.mxu0 0.0
    %170 = vmatpush1.msra.mxu0 0.0
    %171 = vmatprep.subr.mxu0 0.0
    %172 = vmatpush1.msra.mxu0 0.0
    %173 = vmatprep.subr.mxu0 0.0
    %174 = vmatpush1.msra.mxu0 0.0
    %175 = vmatprep.subr.mxu0 0.0
    %176 = vmatpush1.msra.mxu0 0.0
    %177 = vmatprep.subr.mxu0 0.0
    %178 = vmatpush1.msra.mxu0 0.0
    %179 = vmatprep.subr.mxu0 0.0
    %180 = vmatpush1.msra.mxu0 0.0
    %181 = vmatprep.subr.mxu0 %v68
    %182 = vmatpush1.msra.mxu0 %v65
    %183 = vmatprep.subr.mxu0 %v40
    %184 = vmatpush1.msra.mxu0 %v39
    %185 = vmatprep.subr.mxu0 0.0
    %186 = vmatpush2.msra.mxu0 0.0
    %187 = vmatprep.subr.mxu0 0.0
    %188 = vmatpush2.msra.mxu0 0.0
    %189 = vmatprep.subr.mxu0 0.0
    %190 = vmatpush2.msra.mxu0 0.0
    %191 = vmatprep.subr.mxu0 0.0
    %192 = vmatpush2.msra.mxu0 0.0
    %193 = vmatprep.subr.mxu0 0.0
    %194 = vmatpush2.msra.mxu0 0.0
    %195 = vmatprep.subr.mxu0 0.0
    %196 = vmatpush2.msra.mxu0 0.0
    %197 = vmatprep.subr.mxu0 0.0
    %198 = vmatpush2.msra.mxu0 0.0
    %199 = vmatprep.subr.mxu0 0.0
    %200 = vmatpush2.msra.mxu0 0.0
    %201 = vmatprep.subr.mxu0 0.0
    %202 = vmatpush2.msra.mxu0 0.0
    %203 = vmatprep.subr.mxu0 0.0
    %204 = vmatpush2.msra.mxu0 0.0
    %205 = vmatprep.subr.mxu0 0.0
    %206 = vmatpush2.msra.mxu0 0.0
    %207 = vmatprep.subr.mxu0 0.0
    %208 = vmatpush2.msra.mxu0 0.0
    %209 = vmatprep.subr.mxu0 0.0
    %210 = vmatpush2.msra.mxu0 0.0
    %211 = vmatprep.subr.mxu0 0.0
    %212 = vmatpush2.msra.mxu0 0.0
    %213 = vmatprep.subr.mxu0 0.0
    %214 = vmatpush2.msra.mxu0 0.0
    %215 = vmatprep.subr.mxu0 0.0
    %216 = vmatpush2.msra.mxu0 0.0
    %217 = vmatprep.mubr.f32.mxu0 0.0
    %218 = vmatmul.mubr.f32.gmra.mxu0 %v55
    %v219 = vpop.f32.mrf.mxu0
    %v220 = vadd.f32 0.0, %v219
    %v221 = vpop.f32.mrf.mxu0
    %v222 = vadd.f32 0.0, %v221
    %223 = vdwg.mxu0
    %224 = vmatprep.subr.mxu0 0.0
    %225 = vmatpush1.msra.mxu0 0.0
    %226 = vmatprep.subr.mxu0 0.0
    %227 = vmatpush1.msra.mxu0 0.0
    %228 = vmatprep.subr.mxu0 0.0
    %229 = vmatpush1.msra.mxu0 0.0
    %230 = vmatprep.subr.mxu0 0.0
    %231 = vmatpush1.msra.mxu0 0.0
    %232 = vmatprep.subr.mxu0 0.0
    %233 = vmatpush1.msra.mxu0 0.0
    %234 = vmatprep.subr.mxu0 0.0
    %235 = vmatpush1.msra.mxu0 0.0
    %236 = vmatprep.subr.mxu0 0.0
    %237 = vmatpush1.msra.mxu0 0.0
    %238 = vmatprep.subr.mxu0 0.0
    %239 = vmatpush1.msra.mxu0 0.0
    %240 = vmatprep.subr.mxu0 0.0
    %241 = vmatpush1.msra.mxu0 0.0
    %242 = vmatprep.subr.mxu0 0.0
    %243 = vmatpush1.msra.mxu0 0.0
    %244 = vmatprep.subr.mxu0 0.0
    %245 = vmatpush1.msra.mxu0 0.0
    %246 = vmatprep.subr.mxu0 0.0
    %247 = vmatpush1.msra.mxu0 0.0
    %248 = vmatprep.subr.mxu0 0.0
    %249 = vmatpush1.msra.mxu0 0.0
    %250 = vmatprep.subr.mxu0 0.0
    %251 = vmatpush1.msra.mxu0 0.0
    %252 = vmatprep.subr.mxu0 %v74
    %253 = vmatpush1.msra.mxu0 %v71
    %254 = vmatprep.subr.mxu0 %v42
    %255 = vmatpush1.msra.mxu0 %v41
    %256 = vmatprep.subr.mxu0 0.0
    %257 = vmatpush2.msra.mxu0 0.0
    %258 = vmatprep.subr.mxu0 0.0
    %259 = vmatpush2.msra.mxu0 0.0
    %260 = vmatprep.subr.mxu0 0.0
    %261 = vmatpush2.msra.mxu0 0.0
    %262 = vmatprep.subr.mxu0 0.0
    %263 = vmatpush2.msra.mxu0 0.0
    %264 = vmatprep.subr.mxu0 0.0
    %265 = vmatpush2.msra.mxu0 0.0
    %266 = vmatprep.subr.mxu0 0.0
    %267 = vmatpush2.msra.mxu0 0.0
    %268 = vmatprep.subr.mxu0 0.0
    %269 = vmatpush2.msra.mxu0 0.0
    %270 = vmatprep.subr.mxu0 0.0
    %271 = vmatpush2.msra.mxu0 0.0
    %272 = vmatprep.subr.mxu0 0.0
    %273 = vmatpush2.msra.mxu0 0.0
    %274 = vmatprep.subr.mxu0 0.0
    %275 = vmatpush2.msra.mxu0 0.0
    %276 = vmatprep.subr.mxu0 0.0
    %277 = vmatpush2.msra.mxu0 0.0
    %278 = vmatprep.subr.mxu0 0.0
    %279 = vmatpush2.msra.mxu0 0.0
    %280 = vmatprep.subr.mxu0 0.0
    %281 = vmatpush2.msra.mxu0 0.0
    %282 = vmatprep.subr.mxu0 0.0
    %283 = vmatpush2.msra.mxu0 0.0
    %284 = vmatprep.subr.mxu0 0.0
    %285 = vmatpush2.msra.mxu0 0.0
    %286 = vmatprep.subr.mxu0 0.0
    %287 = vmatpush2.msra.mxu0 0.0
    %288 = vmatprep.mubr.f32.mxu0 0.0
    %289 = vmatmul.mubr.f32.gmra.mxu0 %v55
    %v290 = vpop.f32.mrf.mxu0
    %v291 = vadd.f32 0.0, %v290
    %v292 = vpop.f32.mrf.mxu0
    %v293 = vadd.f32 0.0, %v292
    %294 = vdwg.mxu0
    %295 = vmatprep.subr.mxu0 0.0
    %296 = vmatpush1.msra.mxu0 0.0
    %297 = vmatprep.subr.mxu0 0.0
    %298 = vmatpush1.msra.mxu0 0.0
    %299 = vmatprep.subr.mxu0 0.0
    %300 = vmatpush1.msra.mxu0 0.0
    %301 = vmatprep.subr.mxu0 0.0
    %302 = vmatpush1.msra.mxu0 0.0
    %303 = vmatprep.subr.mxu0 0.0
    %304 = vmatpush1.msra.mxu0 0.0
    %305 = vmatprep.subr.mxu0 0.0
    %306 = vmatpush1.msra.mxu0 0.0
    %307 = vmatprep.subr.mxu0 0.0
    %308 = vmatpush1.msra.mxu0 0.0
    %309 = vmatprep.subr.mxu0 0.0
    %310 = vmatpush1.msra.mxu0 0.0
    %311 = vmatprep.subr.mxu0 0.0
    %312 = vmatpush1.msra.mxu0 0.0
    %313 = vmatprep.subr.mxu0 0.0
    %314 = vmatpush1.msra.mxu0 0.0
    %315 = vmatprep.subr.mxu0 0.0
    %316 = vmatpush1.msra.mxu0 0.0
    %317 = vmatprep.subr.mxu0 0.0
    %318 = vmatpush1.msra.mxu0 0.0
    %319 = vmatprep.subr.mxu0 0.0
    %320 = vmatpush1.msra.mxu0 0.0
    %321 = vmatprep.subr.mxu0 0.0
    %322 = vmatpush1.msra.mxu0 0.0
    %323 = vmatprep.subr.mxu0 %v80
    %324 = vmatpush1.msra.mxu0 %v77
    %325 = vmatprep.subr.mxu0 %v44
    %326 = vmatpush1.msra.mxu0 %v43
    %327 = vmatprep.subr.mxu0 0.0
    %328 = vmatpush2.msra.mxu0 0.0
    %329 = vmatprep.subr.mxu0 0.0
    %330 = vmatpush2.msra.mxu0 0.0
    %331 = vmatprep.subr.mxu0 0.0
    %332 = vmatpush2.msra.mxu0 0.0
    %333 = vmatprep.subr.mxu0 0.0
    %334 = vmatpush2.msra.mxu0 0.0
    %335 = vmatprep.subr.mxu0 0.0
    %336 = vmatpush2.msra.mxu0 0.0
    %337 = vmatprep.subr.mxu0 0.0
    %338 = vmatpush2.msra.mxu0 0.0
    %339 = vmatprep.subr.mxu0 0.0
    %340 = vmatpush2.msra.mxu0 0.0
    %341 = vmatprep.subr.mxu0 0.0
    %342 = vmatpush2.msra.mxu0 0.0
    %343 = vmatprep.subr.mxu0 0.0
    %344 = vmatpush2.msra.mxu0 0.0
    %345 = vmatprep.subr.mxu0 0.0
    %346 = vmatpush2.msra.mxu0 0.0
    %347 = vmatprep.subr.mxu0 0.0
    %348 = vmatpush2.msra.mxu0 0.0
    %349 = vmatprep.subr.mxu0 0.0
    %350 = vmatpush2.msra.mxu0 0.0
    %351 = vmatprep.subr.mxu0 0.0
    %352 = vmatpush2.msra.mxu0 0.0
    %353 = vmatprep.subr.mxu0 0.0
    %354 = vmatpush2.msra.mxu0 0.0
    %355 = vmatprep.subr.mxu0 0.0
    %356 = vmatpush2.msra.mxu0 0.0
    %357 = vmatprep.subr.mxu0 0.0
    %358 = vmatpush2.msra.mxu0 0.0
    %359 = vmatprep.mubr.f32.mxu0 0.0
    %360 = vmatmul.mubr.f32.gmra.mxu0 %v55
    %v361 = vpop.f32.mrf.mxu0
    %v362 = vadd.f32 0.0, %v361
    %v363 = vpop.f32.mrf.mxu0
    %v364 = vadd.f32 0.0, %v363
    %365 = vdwg.mxu0
    %v366 = vlaneseq
    %v367 = vand.u32 %v366, 127
    %v368 = vadd.s32 %v367, 128
    %v369 = vadd.s32 %v367, 256
    %v370 = vadd.s32 %v367, 384
    %v371 = vadd.s32 %v367, 512
    %v372 = vadd.s32 %v367, 640
    %v373 = vadd.s32 %v367, 768
    %v374 = vadd.s32 %v367, 896
    %375 = vset.pattern.permute.xlu0 0
    %376 = vperm.xlu0 %375, %v32
    %v377 = vpop.permute.xlu0 %376
    %378 = vset.pattern.permute.xlu0 0
    %379 = vperm.xlu0 %378, %v33
    %v380 = vpop.permute.xlu0 %379
    %381 = vset.pattern.permute.xlu0 0
    %382 = vperm.xlu0 %381, %v34
    %v383 = vpop.permute.xlu0 %382
    %384 = vset.pattern.permute.xlu0 0
    %385 = vperm.xlu0 %384, %v35
    %v386 = vpop.permute.xlu0 %385
    %vm387 = vcmp.eq.s32.totalorder %v377, %v367
    %vm388 = vcmp.eq.s32.totalorder %v377, %v368
    %vm389 = vcmp.eq.s32.totalorder %v377, %v369
    %vm390 = vcmp.eq.s32.totalorder %v377, %v370
    %vm391 = vcmp.eq.s32.totalorder %v377, %v371
    %vm392 = vcmp.eq.s32.totalorder %v377, %v372
    %vm393 = vcmp.eq.s32.totalorder %v377, %v373
    %vm394 = vcmp.eq.s32.totalorder %v377, %v374
    %vm395 = vcmp.eq.s32.totalorder %v380, %v367
    %vm396 = vcmp.eq.s32.totalorder %v380, %v368
    %vm397 = vcmp.eq.s32.totalorder %v380, %v369
    %vm398 = vcmp.eq.s32.totalorder %v380, %v370
    %vm399 = vcmp.eq.s32.totalorder %v380, %v371
    %vm400 = vcmp.eq.s32.totalorder %v380, %v372
    %vm401 = vcmp.eq.s32.totalorder %v380, %v373
    %vm402 = vcmp.eq.s32.totalorder %v380, %v374
    %vm403 = vcmp.eq.s32.totalorder %v383, %v367
    %vm404 = vcmp.eq.s32.totalorder %v383, %v368
    %vm405 = vcmp.eq.s32.totalorder %v383, %v369
    %vm406 = vcmp.eq.s32.totalorder %v383, %v370
    %vm407 = vcmp.eq.s32.totalorder %v383, %v371
    %vm408 = vcmp.eq.s32.totalorder %v383, %v372
    %vm409 = vcmp.eq.s32.totalorder %v383, %v373
    %vm410 = vcmp.eq.s32.totalorder %v383, %v374
    %vm411 = vcmp.eq.s32.totalorder %v386, %v367
    %vm412 = vcmp.eq.s32.totalorder %v386, %v368
    %vm413 = vcmp.eq.s32.totalorder %v386, %v369
    %vm414 = vcmp.eq.s32.totalorder %v386, %v370
    %vm415 = vcmp.eq.s32.totalorder %v386, %v371
    %vm416 = vcmp.eq.s32.totalorder %v386, %v372
    %vm417 = vcmp.eq.s32.totalorder %v386, %v373
    %vm418 = vcmp.eq.s32.totalorder %v386, %v374
    %v419 = vsel %vm387, 1, 0
    %v420 = vsel %vm388, 1, 0
    %v421 = vsel %vm389, 1, 0
    %v422 = vsel %vm390, 1, 0
    %v423 = vsel %vm391, 1, 0
    %v424 = vsel %vm392, 1, 0
    %v425 = vsel %vm393, 1, 0
    %v426 = vsel %vm394, 1, 0
    %v427 = vsel %vm395, 1, 0
    %v428 = vsel %vm396, 1, 0
    %v429 = vsel %vm397, 1, 0
    %v430 = vsel %vm398, 1, 0
    %v431 = vsel %vm399, 1, 0
    %v432 = vsel %vm400, 1, 0
    %v433 = vsel %vm401, 1, 0
    %v434 = vsel %vm402, 1, 0
    %v435 = vsel %vm403, 1, 0
    %v436 = vsel %vm404, 1, 0
    %v437 = vsel %vm405, 1, 0
    %v438 = vsel %vm406, 1, 0
    %v439 = vsel %vm407, 1, 0
    %v440 = vsel %vm408, 1, 0
    %v441 = vsel %vm409, 1, 0
    %v442 = vsel %vm410, 1, 0
    %v443 = vsel %vm411, 1, 0
    %v444 = vsel %vm412, 1, 0
    %v445 = vsel %vm413, 1, 0
    %v446 = vsel %vm414, 1, 0
    %v447 = vsel %vm415, 1, 0
    %v448 = vsel %vm416, 1, 0
    %v449 = vsel %vm417, 1, 0
    %v450 = vsel %vm418, 1, 0
    %451 = vset.pattern.permute.xlu0 1
    %452 = vperm.xlu0 %451, %v32
    %v453 = vpop.permute.xlu0 %452
    %454 = vset.pattern.permute.xlu0 1
    %455 = vperm.xlu0 %454, %v33
    %v456 = vpop.permute.xlu0 %455
    %457 = vset.pattern.permute.xlu0 1
    %458 = vperm.xlu0 %457, %v34
    %v459 = vpop.permute.xlu0 %458
    %460 = vset.pattern.permute.xlu0 1
    %461 = vperm.xlu0 %460, %v35
    %v462 = vpop.permute.xlu0 %461
    %vm463 = vcmp.eq.s32.totalorder %v453, %v367
    %vm464 = vcmp.eq.s32.totalorder %v453, %v368
    %vm465 = vcmp.eq.s32.totalorder %v453, %v369
    %vm466 = vcmp.eq.s32.totalorder %v453, %v370
    %vm467 = vcmp.eq.s32.totalorder %v453, %v371
    %vm468 = vcmp.eq.s32.totalorder %v453, %v372
    %vm469 = vcmp.eq.s32.totalorder %v453, %v373
    %vm470 = vcmp.eq.s32.totalorder %v453, %v374
    %vm471 = vcmp.eq.s32.totalorder %v456, %v367
    %vm472 = vcmp.eq.s32.totalorder %v456, %v368
    %vm473 = vcmp.eq.s32.totalorder %v456, %v369
    %vm474 = vcmp.eq.s32.totalorder %v456, %v370
    %vm475 = vcmp.eq.s32.totalorder %v456, %v371
    %vm476 = vcmp.eq.s32.totalorder %v456, %v372
    %vm477 = vcmp.eq.s32.totalorder %v456, %v373
    %vm478 = vcmp.eq.s32.totalorder %v456, %v374
    %vm479 = vcmp.eq.s32.totalorder %v459, %v367
    %vm480 = vcmp.eq.s32.totalorder %v459, %v368
    %vm481 = vcmp.eq.s32.totalorder %v459, %v369
    %vm482 = vcmp.eq.s32.totalorder %v459, %v370
    %vm483 = vcmp.eq.s32.totalorder %v459, %v371
    %vm484 = vcmp.eq.s32.totalorder %v459, %v372
    %vm485 = vcmp.eq.s32.totalorder %v459, %v373
    %vm486 = vcmp.eq.s32.totalorder %v459, %v374
    %vm487 = vcmp.eq.s32.totalorder %v462, %v367
    %vm488 = vcmp.eq.s32.totalorder %v462, %v368
    %vm489 = vcmp.eq.s32.totalorder %v462, %v369
    %vm490 = vcmp.eq.s32.totalorder %v462, %v370
    %vm491 = vcmp.eq.s32.totalorder %v462, %v371
    %vm492 = vcmp.eq.s32.totalorder %v462, %v372
    %vm493 = vcmp.eq.s32.totalorder %v462, %v373
    %vm494 = vcmp.eq.s32.totalorder %v462, %v374
    %v495 = vsel %vm463, 1, 0
    %v496 = vsel %vm464, 1, 0
    %v497 = vsel %vm465, 1, 0
    %v498 = vsel %vm466, 1, 0
    %v499 = vsel %vm467, 1, 0
    %v500 = vsel %vm468, 1, 0
    %v501 = vsel %vm469, 1, 0
    %v502 = vsel %vm470, 1, 0
    %v503 = vsel %vm471, 1, 0
    %v504 = vsel %vm472, 1, 0
    %v505 = vsel %vm473, 1, 0
    %v506 = vsel %vm474, 1, 0
    %v507 = vsel %vm475, 1, 0
    %v508 = vsel %vm476, 1, 0
    %v509 = vsel %vm477, 1, 0
    %v510 = vsel %vm478, 1, 0
    %v511 = vsel %vm479, 1, 0
    %v512 = vsel %vm480, 1, 0
    %v513 = vsel %vm481, 1, 0
    %v514 = vsel %vm482, 1, 0
    %v515 = vsel %vm483, 1, 0
    %v516 = vsel %vm484, 1, 0
    %v517 = vsel %vm485, 1, 0
    %v518 = vsel %vm486, 1, 0
    %v519 = vsel %vm487, 1, 0
    %v520 = vsel %vm488, 1, 0
    %v521 = vsel %vm489, 1, 0
    %v522 = vsel %vm490, 1, 0
    %v523 = vsel %vm491, 1, 0
    %v524 = vsel %vm492, 1, 0
    %v525 = vsel %vm493, 1, 0
    %v526 = vsel %vm494, 1, 0
    %v527 = vadd.s32 %v419, %v495
    %v528 = vadd.s32 %v420, %v496
    %v529 = vadd.s32 %v421, %v497
    %v530 = vadd.s32 %v422, %v498
    %v531 = vadd.s32 %v423, %v499
    %v532 = vadd.s32 %v424, %v500
    %v533 = vadd.s32 %v425, %v501
    %v534 = vadd.s32 %v426, %v502
    %v535 = vadd.s32 %v427, %v503
    %v536 = vadd.s32 %v428, %v504
    %v537 = vadd.s32 %v429, %v505
    %v538 = vadd.s32 %v430, %v506
    %v539 = vadd.s32 %v431, %v507
    %v540 = vadd.s32 %v432, %v508
    %v541 = vadd.s32 %v433, %v509
    %v542 = vadd.s32 %v434, %v510
    %v543 = vadd.s32 %v435, %v511
    %v544 = vadd.s32 %v436, %v512
    %v545 = vadd.s32 %v437, %v513
    %v546 = vadd.s32 %v438, %v514
    %v547 = vadd.s32 %v439, %v515
    %v548 = vadd.s32 %v440, %v516
    %v549 = vadd.s32 %v441, %v517
    %v550 = vadd.s32 %v442, %v518
    %v551 = vadd.s32 %v443, %v519
    %v552 = vadd.s32 %v444, %v520
    %v553 = vadd.s32 %v445, %v521
    %v554 = vadd.s32 %v446, %v522
    %v555 = vadd.s32 %v447, %v523
    %v556 = vadd.s32 %v448, %v524
    %v557 = vadd.s32 %v449, %v525
    %v558 = vadd.s32 %v450, %v526
    %559 = vset.pattern.permute.xlu0 2
    %560 = vperm.xlu0 %559, %v32
    %v561 = vpop.permute.xlu0 %560
    %562 = vset.pattern.permute.xlu0 2
    %563 = vperm.xlu0 %562, %v33
    %v564 = vpop.permute.xlu0 %563
    %565 = vset.pattern.permute.xlu0 2
    %566 = vperm.xlu0 %565, %v34
    %v567 = vpop.permute.xlu0 %566
    %568 = vset.pattern.permute.xlu0 2
    %569 = vperm.xlu0 %568, %v35
    %v570 = vpop.permute.xlu0 %569
    %vm571 = vcmp.eq.s32.totalorder %v561, %v367
    %vm572 = vcmp.eq.s32.totalorder %v561, %v368
    %vm573 = vcmp.eq.s32.totalorder %v561, %v369
    %vm574 = vcmp.eq.s32.totalorder %v561, %v370
    %vm575 = vcmp.eq.s32.totalorder %v561, %v371
    %vm576 = vcmp.eq.s32.totalorder %v561, %v372
    %vm577 = vcmp.eq.s32.totalorder %v561, %v373
    %vm578 = vcmp.eq.s32.totalorder %v561, %v374
    %vm579 = vcmp.eq.s32.totalorder %v564, %v367
    %vm580 = vcmp.eq.s32.totalorder %v564, %v368
    %vm581 = vcmp.eq.s32.totalorder %v564, %v369
    %vm582 = vcmp.eq.s32.totalorder %v564, %v370
    %vm583 = vcmp.eq.s32.totalorder %v564, %v371
    %vm584 = vcmp.eq.s32.totalorder %v564, %v372
    %vm585 = vcmp.eq.s32.totalorder %v564, %v373
    %vm586 = vcmp.eq.s32.totalorder %v564, %v374
    %vm587 = vcmp.eq.s32.totalorder %v567, %v367
    %vm588 = vcmp.eq.s32.totalorder %v567, %v368
    %vm589 = vcmp.eq.s32.totalorder %v567, %v369
    %vm590 = vcmp.eq.s32.totalorder %v567, %v370
    %vm591 = vcmp.eq.s32.totalorder %v567, %v371
    %vm592 = vcmp.eq.s32.totalorder %v567, %v372
    %vm593 = vcmp.eq.s32.totalorder %v567, %v373
    %vm594 = vcmp.eq.s32.totalorder %v567, %v374
    %vm595 = vcmp.eq.s32.totalorder %v570, %v367
    %vm596 = vcmp.eq.s32.totalorder %v570, %v368
    %vm597 = vcmp.eq.s32.totalorder %v570, %v369
    %vm598 = vcmp.eq.s32.totalorder %v570, %v370
    %vm599 = vcmp.eq.s32.totalorder %v570, %v371
    %vm600 = vcmp.eq.s32.totalorder %v570, %v372
    %vm601 = vcmp.eq.s32.totalorder %v570, %v373
    %vm602 = vcmp.eq.s32.totalorder %v570, %v374
    %v603 = vsel %vm571, 1, 0
    %v604 = vsel %vm572, 1, 0
    %v605 = vsel %vm573, 1, 0
    %v606 = vsel %vm574, 1, 0
    %v607 = vsel %vm575, 1, 0
    %v608 = vsel %vm576, 1, 0
    %v609 = vsel %vm577, 1, 0
    %v610 = vsel %vm578, 1, 0
    %v611 = vsel %vm579, 1, 0
    %v612 = vsel %vm580, 1, 0
    %v613 = vsel %vm581, 1, 0
    %v614 = vsel %vm582, 1, 0
    %v615 = vsel %vm583, 1, 0
    %v616 = vsel %vm584, 1, 0
    %v617 = vsel %vm585, 1, 0
    %v618 = vsel %vm586, 1, 0
    %v619 = vsel %vm587, 1, 0
    %v620 = vsel %vm588, 1, 0
    %v621 = vsel %vm589, 1, 0
    %v622 = vsel %vm590, 1, 0
    %v623 = vsel %vm591, 1, 0
    %v624 = vsel %vm592, 1, 0
    %v625 = vsel %vm593, 1, 0
    %v626 = vsel %vm594, 1, 0
    %v627 = vsel %vm595, 1, 0
    %v628 = vsel %vm596, 1, 0
    %v629 = vsel %vm597, 1, 0
    %v630 = vsel %vm598, 1, 0
    %v631 = vsel %vm599, 1, 0
    %v632 = vsel %vm600, 1, 0
    %v633 = vsel %vm601, 1, 0
    %v634 = vsel %vm602, 1, 0
    %v635 = vadd.s32 %v527, %v603
    %v636 = vadd.s32 %v528, %v604
    %v637 = vadd.s32 %v529, %v605
    %v638 = vadd.s32 %v530, %v606
    %v639 = vadd.s32 %v531, %v607
    %v640 = vadd.s32 %v532, %v608
    %v641 = vadd.s32 %v533, %v609
    %v642 = vadd.s32 %v534, %v610
    %v643 = vadd.s32 %v535, %v611
    %v644 = vadd.s32 %v536, %v612
    %v645 = vadd.s32 %v537, %v613
    %v646 = vadd.s32 %v538, %v614
    %v647 = vadd.s32 %v539, %v615
    %v648 = vadd.s32 %v540, %v616
    %v649 = vadd.s32 %v541, %v617
    %v650 = vadd.s32 %v542, %v618
    %v651 = vadd.s32 %v543, %v619
    %v652 = vadd.s32 %v544, %v620
    %v653 = vadd.s32 %v545, %v621
    %v654 = vadd.s32 %v546, %v622
    %v655 = vadd.s32 %v547, %v623
    %v656 = vadd.s32 %v548, %v624
    %v657 = vadd.s32 %v549, %v625
    %v658 = vadd.s32 %v550, %v626
    %v659 = vadd.s32 %v551, %v627
    %v660 = vadd.s32 %v552, %v628
    %v661 = vadd.s32 %v553, %v629
    %v662 = vadd.s32 %v554, %v630
    %v663 = vadd.s32 %v555, %v631
    %v664 = vadd.s32 %v556, %v632
    %v665 = vadd.s32 %v557, %v633
    %v666 = vadd.s32 %v558, %v634
    %667 = vset.pattern.permute.xlu0 3
    %668 = vperm.xlu0 %667, %v32
    %v669 = vpop.permute.xlu0 %668
    %670 = vset.pattern.permute.xlu0 3
    %671 = vperm.xlu0 %670, %v33
    %v672 = vpop.permute.xlu0 %671
    %673 = vset.pattern.permute.xlu0 3
    %674 = vperm.xlu0 %673, %v34
    %v675 = vpop.permute.xlu0 %674
    %676 = vset.pattern.permute.xlu0 3
    %677 = vperm.xlu0 %676, %v35
    %v678 = vpop.permute.xlu0 %677
    %vm679 = vcmp.eq.s32.totalorder %v669, %v367
    %vm680 = vcmp.eq.s32.totalorder %v669, %v368
    %vm681 = vcmp.eq.s32.totalorder %v669, %v369
    %vm682 = vcmp.eq.s32.totalorder %v669, %v370
    %vm683 = vcmp.eq.s32.totalorder %v669, %v371
    %vm684 = vcmp.eq.s32.totalorder %v669, %v372
    %vm685 = vcmp.eq.s32.totalorder %v669, %v373
    %vm686 = vcmp.eq.s32.totalorder %v669, %v374
    %vm687 = vcmp.eq.s32.totalorder %v672, %v367
    %vm688 = vcmp.eq.s32.totalorder %v672, %v368
    %vm689 = vcmp.eq.s32.totalorder %v672, %v369
    %vm690 = vcmp.eq.s32.totalorder %v672, %v370
    %vm691 = vcmp.eq.s32.totalorder %v672, %v371
    %vm692 = vcmp.eq.s32.totalorder %v672, %v372
    %vm693 = vcmp.eq.s32.totalorder %v672, %v373
    %vm694 = vcmp.eq.s32.totalorder %v672, %v374
    %vm695 = vcmp.eq.s32.totalorder %v675, %v367
    %vm696 = vcmp.eq.s32.totalorder %v675, %v368
    %vm697 = vcmp.eq.s32.totalorder %v675, %v369
    %vm698 = vcmp.eq.s32.totalorder %v675, %v370
    %vm699 = vcmp.eq.s32.totalorder %v675, %v371
    %vm700 = vcmp.eq.s32.totalorder %v675, %v372
    %vm701 = vcmp.eq.s32.totalorder %v675, %v373
    %vm702 = vcmp.eq.s32.totalorder %v675, %v374
    %vm703 = vcmp.eq.s32.totalorder %v678, %v367
    %vm704 = vcmp.eq.s32.totalorder %v678, %v368
    %vm705 = vcmp.eq.s32.totalorder %v678, %v369
    %vm706 = vcmp.eq.s32.totalorder %v678, %v370
    %vm707 = vcmp.eq.s32.totalorder %v678, %v371
    %vm708 = vcmp.eq.s32.totalorder %v678, %v372
    %vm709 = vcmp.eq.s32.totalorder %v678, %v373
    %vm710 = vcmp.eq.s32.totalorder %v678, %v374
    %v711 = vsel %vm679, 1, 0
    %v712 = vsel %vm680, 1, 0
    %v713 = vsel %vm681, 1, 0
    %v714 = vsel %vm682, 1, 0
    %v715 = vsel %vm683, 1, 0
    %v716 = vsel %vm684, 1, 0
    %v717 = vsel %vm685, 1, 0
    %v718 = vsel %vm686, 1, 0
    %v719 = vsel %vm687, 1, 0
    %v720 = vsel %vm688, 1, 0
    %v721 = vsel %vm689, 1, 0
    %v722 = vsel %vm690, 1, 0
    %v723 = vsel %vm691, 1, 0
    %v724 = vsel %vm692, 1, 0
    %v725 = vsel %vm693, 1, 0
    %v726 = vsel %vm694, 1, 0
    %v727 = vsel %vm695, 1, 0
    %v728 = vsel %vm696, 1, 0
    %v729 = vsel %vm697, 1, 0
    %v730 = vsel %vm698, 1, 0
    %v731 = vsel %vm699, 1, 0
    %v732 = vsel %vm700, 1, 0
    %v733 = vsel %vm701, 1, 0
    %v734 = vsel %vm702, 1, 0
    %v735 = vsel %vm703, 1, 0
    %v736 = vsel %vm704, 1, 0
    %v737 = vsel %vm705, 1, 0
    %v738 = vsel %vm706, 1, 0
    %v739 = vsel %vm707, 1, 0
    %v740 = vsel %vm708, 1, 0
    %v741 = vsel %vm709, 1, 0
    %v742 = vsel %vm710, 1, 0
    %v743 = vadd.s32 %v635, %v711
    %v744 = vadd.s32 %v636, %v712
    %v745 = vadd.s32 %v637, %v713
    %v746 = vadd.s32 %v638, %v714
    %v747 = vadd.s32 %v639, %v715
    %v748 = vadd.s32 %v640, %v716
    %v749 = vadd.s32 %v641, %v717
    %v750 = vadd.s32 %v642, %v718
    %v751 = vadd.s32 %v643, %v719
    %v752 = vadd.s32 %v644, %v720
    %v753 = vadd.s32 %v645, %v721
    %v754 = vadd.s32 %v646, %v722
    %v755 = vadd.s32 %v647, %v723
    %v756 = vadd.s32 %v648, %v724
    %v757 = vadd.s32 %v649, %v725
    %v758 = vadd.s32 %v650, %v726
    %v759 = vadd.s32 %v651, %v727
    %v760 = vadd.s32 %v652, %v728
    %v761 = vadd.s32 %v653, %v729
    %v762 = vadd.s32 %v654, %v730
    %v763 = vadd.s32 %v655, %v731
    %v764 = vadd.s32 %v656, %v732
    %v765 = vadd.s32 %v657, %v733
    %v766 = vadd.s32 %v658, %v734
    %v767 = vadd.s32 %v659, %v735
    %v768 = vadd.s32 %v660, %v736
    %v769 = vadd.s32 %v661, %v737
    %v770 = vadd.s32 %v662, %v738
    %v771 = vadd.s32 %v663, %v739
    %v772 = vadd.s32 %v664, %v740
    %v773 = vadd.s32 %v665, %v741
    %v774 = vadd.s32 %v666, %v742
    %775 = vset.pattern.permute.xlu0 4
    %776 = vperm.xlu0 %775, %v32
    %v777 = vpop.permute.xlu0 %776
    %778 = vset.pattern.permute.xlu0 4
    %779 = vperm.xlu0 %778, %v33
    %v780 = vpop.permute.xlu0 %779
    %781 = vset.pattern.permute.xlu0 4
    %782 = vperm.xlu0 %781, %v34
    %v783 = vpop.permute.xlu0 %782
    %784 = vset.pattern.permute.xlu0 4
    %785 = vperm.xlu0 %784, %v35
    %v786 = vpop.permute.xlu0 %785
    %vm787 = vcmp.eq.s32.totalorder %v777, %v367
    %vm788 = vcmp.eq.s32.totalorder %v777, %v368
    %vm789 = vcmp.eq.s32.totalorder %v777, %v369
    %vm790 = vcmp.eq.s32.totalorder %v777, %v370
    %vm791 = vcmp.eq.s32.totalorder %v777, %v371
    %vm792 = vcmp.eq.s32.totalorder %v777, %v372
    %vm793 = vcmp.eq.s32.totalorder %v777, %v373
    %vm794 = vcmp.eq.s32.totalorder %v777, %v374
    %vm795 = vcmp.eq.s32.totalorder %v780, %v367
    %vm796 = vcmp.eq.s32.totalorder %v780, %v368
    %vm797 = vcmp.eq.s32.totalorder %v780, %v369
    %vm798 = vcmp.eq.s32.totalorder %v780, %v370
    %vm799 = vcmp.eq.s32.totalorder %v780, %v371
    %vm800 = vcmp.eq.s32.totalorder %v780, %v372
    %vm801 = vcmp.eq.s32.totalorder %v780, %v373
    %vm802 = vcmp.eq.s32.totalorder %v780, %v374
    %vm803 = vcmp.eq.s32.totalorder %v783, %v367
    %vm804 = vcmp.eq.s32.totalorder %v783, %v368
    %vm805 = vcmp.eq.s32.totalorder %v783, %v369
    %vm806 = vcmp.eq.s32.totalorder %v783, %v370
    %vm807 = vcmp.eq.s32.totalorder %v783, %v371
    %vm808 = vcmp.eq.s32.totalorder %v783, %v372
    %vm809 = vcmp.eq.s32.totalorder %v783, %v373
    %vm810 = vcmp.eq.s32.totalorder %v783, %v374
    %vm811 = vcmp.eq.s32.totalorder %v786, %v367
    %vm812 = vcmp.eq.s32.totalorder %v786, %v368
    %vm813 = vcmp.eq.s32.totalorder %v786, %v369
    %vm814 = vcmp.eq.s32.totalorder %v786, %v370
    %vm815 = vcmp.eq.s32.totalorder %v786, %v371
    %vm816 = vcmp.eq.s32.totalorder %v786, %v372
    %vm817 = vcmp.eq.s32.totalorder %v786, %v373
    %vm818 = vcmp.eq.s32.totalorder %v786, %v374
    %v819 = vsel %vm787, 1, 0
    %v820 = vsel %vm788, 1, 0
    %v821 = vsel %vm789, 1, 0
    %v822 = vsel %vm790, 1, 0
    %v823 = vsel %vm791, 1, 0
    %v824 = vsel %vm792, 1, 0
    %v825 = vsel %vm793, 1, 0
    %v826 = vsel %vm794, 1, 0
    %v827 = vsel %vm795, 1, 0
    %v828 = vsel %vm796, 1, 0
    %v829 = vsel %vm797, 1, 0
    %v830 = vsel %vm798, 1, 0
    %v831 = vsel %vm799, 1, 0
    %v832 = vsel %vm800, 1, 0
    %v833 = vsel %vm801, 1, 0
    %v834 = vsel %vm802, 1, 0
    %v835 = vsel %vm803, 1, 0
    %v836 = vsel %vm804, 1, 0
    %v837 = vsel %vm805, 1, 0
    %v838 = vsel %vm806, 1, 0
    %v839 = vsel %vm807, 1, 0
    %v840 = vsel %vm808, 1, 0
    %v841 = vsel %vm809, 1, 0
    %v842 = vsel %vm810, 1, 0
    %v843 = vsel %vm811, 1, 0
    %v844 = vsel %vm812, 1, 0
    %v845 = vsel %vm813, 1, 0
    %v846 = vsel %vm814, 1, 0
    %v847 = vsel %vm815, 1, 0
    %v848 = vsel %vm816, 1, 0
    %v849 = vsel %vm817, 1, 0
    %v850 = vsel %vm818, 1, 0
    %v851 = vadd.s32 %v743, %v819
    %v852 = vadd.s32 %v744, %v820
    %v853 = vadd.s32 %v745, %v821
    %v854 = vadd.s32 %v746, %v822
    %v855 = vadd.s32 %v747, %v823
    %v856 = vadd.s32 %v748, %v824
    %v857 = vadd.s32 %v749, %v825
    %v858 = vadd.s32 %v750, %v826
    %v859 = vadd.s32 %v751, %v827
    %v860 = vadd.s32 %v752, %v828
    %v861 = vadd.s32 %v753, %v829
    %v862 = vadd.s32 %v754, %v830
    %v863 = vadd.s32 %v755, %v831
    %v864 = vadd.s32 %v756, %v832
    %v865 = vadd.s32 %v757, %v833
    %v866 = vadd.s32 %v758, %v834
    %v867 = vadd.s32 %v759, %v835
    %v868 = vadd.s32 %v760, %v836
    %v869 = vadd.s32 %v761, %v837
    %v870 = vadd.s32 %v762, %v838
    %v871 = vadd.s32 %v763, %v839
    %v872 = vadd.s32 %v764, %v840
    %v873 = vadd.s32 %v765, %v841
    %v874 = vadd.s32 %v766, %v842
    %v875 = vadd.s32 %v767, %v843
    %v876 = vadd.s32 %v768, %v844
    %v877 = vadd.s32 %v769, %v845
    %v878 = vadd.s32 %v770, %v846
    %v879 = vadd.s32 %v771, %v847
    %v880 = vadd.s32 %v772, %v848
    %v881 = vadd.s32 %v773, %v849
    %v882 = vadd.s32 %v774, %v850
    %v883 = vcvt.s32.f32 %v851
    %v884 = vcvt.s32.f32 %v852
    %v885 = vcvt.s32.f32 %v853
    %v886 = vcvt.s32.f32 %v854
    %v887 = vcvt.s32.f32 %v855
    %v888 = vcvt.s32.f32 %v856
    %v889 = vcvt.s32.f32 %v857
    %v890 = vcvt.s32.f32 %v858
    %v891 = vcvt.s32.f32 %v859
    %v892 = vcvt.s32.f32 %v860
    %v893 = vcvt.s32.f32 %v861
    %v894 = vcvt.s32.f32 %v862
    %v895 = vcvt.s32.f32 %v863
    %v896 = vcvt.s32.f32 %v864
    %v897 = vcvt.s32.f32 %v865
    %v898 = vcvt.s32.f32 %v866
    %v899 = vcvt.s32.f32 %v867
    %v900 = vcvt.s32.f32 %v868
    %v901 = vcvt.s32.f32 %v869
    %v902 = vcvt.s32.f32 %v870
    %v903 = vcvt.s32.f32 %v871
    %v904 = vcvt.s32.f32 %v872
    %v905 = vcvt.s32.f32 %v873
    %v906 = vcvt.s32.f32 %v874
    %v907 = vcvt.s32.f32 %v875
    %v908 = vcvt.s32.f32 %v876
    %v909 = vcvt.s32.f32 %v877
    %v910 = vcvt.s32.f32 %v878
    %v911 = vcvt.s32.f32 %v879
    %v912 = vcvt.s32.f32 %v880
    %v913 = vcvt.s32.f32 %v881
    %v914 = vcvt.s32.f32 %v882
    %v915 = vlaneseq
    %v916 = vshrl.u32 %v915, 7
    %v917 = vsub.s32 0, %v916
    %v918 = vrot.slane %v149, %v917
    %v919 = vlaneseq
    %v920 = vshrl.u32 %v919, 7
    %v921 = vsub.s32 0, %v920
    %v922 = vrot.slane %v151, %v921
    %v923 = vlaneseq
    %v924 = vshrl.u32 %v923, 7
    %v925 = vsub.s32 0, %v924
    %v926 = vrot.slane %v220, %v925
    %v927 = vlaneseq
    %v928 = vshrl.u32 %v927, 7
    %v929 = vsub.s32 0, %v928
    %v930 = vrot.slane %v222, %v929
    %v931 = vlaneseq
    %v932 = vshrl.u32 %v931, 7
    %v933 = vsub.s32 0, %v932
    %v934 = vrot.slane %v291, %v933
    %v935 = vlaneseq
    %v936 = vshrl.u32 %v935, 7
    %v937 = vsub.s32 0, %v936
    %v938 = vrot.slane %v293, %v937
    %v939 = vlaneseq
    %v940 = vshrl.u32 %v939, 7
    %v941 = vsub.s32 0, %v940
    %v942 = vrot.slane %v362, %v941
    %v943 = vlaneseq
    %v944 = vshrl.u32 %v943, 7
    %v945 = vsub.s32 0, %v944
    %v946 = vrot.slane %v364, %v945
    %v947 = vmul.f32 %v883, %v918
    %v948 = vmul.f32 %v884, %v922
    %v949 = vmul.f32 %v885, %v926
    %v950 = vmul.f32 %v886, %v930
    %v951 = vmul.f32 %v887, %v934
    %v952 = vmul.f32 %v888, %v938
    %v953 = vmul.f32 %v889, %v942
    %v954 = vmul.f32 %v890, %v946
    %v955 = vmul.f32 %v891, %v918
    %v956 = vmul.f32 %v892, %v922
    %v957 = vmul.f32 %v893, %v926
    %v958 = vmul.f32 %v894, %v930
    %v959 = vmul.f32 %v895, %v934
    %v960 = vmul.f32 %v896, %v938
    %v961 = vmul.f32 %v897, %v942
    %v962 = vmul.f32 %v898, %v946
    %v963 = vmul.f32 %v899, %v918
    %v964 = vmul.f32 %v900, %v922
    %v965 = vmul.f32 %v901, %v926
    %v966 = vmul.f32 %v902, %v930
    %v967 = vmul.f32 %v903, %v934
    %v968 = vmul.f32 %v904, %v938
    %v969 = vmul.f32 %v905, %v942
    %v970 = vmul.f32 %v906, %v946
    %v971 = vmul.f32 %v907, %v918
    %v972 = vmul.f32 %v908, %v922
    %v973 = vmul.f32 %v909, %v926
    %v974 = vmul.f32 %v910, %v930
    %v975 = vmul.f32 %v911, %v934
    %v976 = vmul.f32 %v912, %v938
    %v977 = vmul.f32 %v913, %v942
    %v978 = vmul.f32 %v914, %v946
    %v979 = vadd.f32 %v947, %v948
    %v980 = vadd.f32 %v979, %v949
    %v981 = vadd.f32 %v980, %v950
    %v982 = vadd.f32 %v981, %v951
    %v983 = vadd.f32 %v982, %v952
    %v984 = vadd.f32 %v983, %v953
    %vm985 = vcmask 850944
    %v986 = vsel %vm985, %v954, 0.0
    %v987 = vadd.f32 %v984, %v986
    %988 = vadd.xlane.f32.xlu0 %v987
    %v989 = vpop.xlane.xlu0 %988
    %v990 = vadd.f32 %v955, %v956
    %v991 = vadd.f32 %v990, %v957
    %v992 = vadd.f32 %v991, %v958
    %v993 = vadd.f32 %v992, %v959
    %v994 = vadd.f32 %v993, %v960
    %v995 = vadd.f32 %v994, %v961
    %v996 = vsel %vm985, %v962, 0.0
    %v997 = vadd.f32 %v995, %v996
    %998 = vadd.xlane.f32.xlu0 %v997
    %v999 = vpop.xlane.xlu0 %998
    %v1000 = vadd.f32 %v963, %v964
    %v1001 = vadd.f32 %v1000, %v965
    %v1002 = vadd.f32 %v1001, %v966
    %v1003 = vadd.f32 %v1002, %v967
    %v1004 = vadd.f32 %v1003, %v968
    %v1005 = vadd.f32 %v1004, %v969
    %v1006 = vsel %vm985, %v970, 0.0
    %v1007 = vadd.f32 %v1005, %v1006
    %1008 = vadd.xlane.f32.xlu0 %v1007
    %v1009 = vpop.xlane.xlu0 %1008
    %v1010 = vadd.f32 %v971, %v972
    %v1011 = vadd.f32 %v1010, %v973
    %v1012 = vadd.f32 %v1011, %v974
    %v1013 = vadd.f32 %v1012, %v975
    %v1014 = vadd.f32 %v1013, %v976
    %v1015 = vadd.f32 %v1014, %v977
    %v1016 = vsel %vm985, %v978, 0.0
    %v1017 = vadd.f32 %v1015, %v1016
    %1018 = vadd.xlane.f32.xlu0 %v1017
    %v1019 = vpop.xlane.xlu0 %1018
    %v1020 = vmul.f32 %v989, 0.2
    %v1021 = vmul.f32 %v999, 0.2
    %v1022 = vmul.f32 %v1009, 0.2
    %v1023 = vmul.f32 %v1019, 0.2
    %s1024 = sld [smem:[#allocation2]]
    %v1025 = vstv %s1024
    %v1026 = vadd.f32 %v1020, %v1025
    %v1027 = vadd.f32 %v1021, %v1025
    %v1028 = vadd.f32 %v1022, %v1025
    %v1029 = vadd.f32 %v1023, %v1025
    %vm1030 = vcmask 7168
    %1031 = vst.msk [vmem:[%s4] sm:$0xff] %vm1030, %v1026
    %1032 = vst.msk [vmem:[%s4 + $0x8] sm:$0xff] %vm1030, %v1027
    %1033 = vst.msk [vmem:[%s4 + $0x10] sm:$0xff] %vm1030, %v1028
    %1034 = vst.msk [vmem:[%s4 + $0x18] sm:$0xff] %vm1030, %v1029
    // Predicated region
    $region22: #{tpu_custom_call.1} parent=1 // pred_check
      _
    $region23: #{tpu_custom_call.1} parent=1 // pred_check_branch
      %1036 = sbr.rel (0) target = $region25
    $region24: #{tpu_custom_call.1} parent=1 // pred_region
      _
    $region25: #{tpu_custom_call.1} parent=1 // pred_fallthru
      _
    // Predicated region
    $region26: #{tpu_custom_call.1} parent=1 // pred_check
      _
    $region27: #{tpu_custom_call.1} parent=1 // pred_check_branch
      %1038 = sbr.rel (0) target = $region29
    $region28: #{tpu_custom_call.1} parent=1 // pred_region
      _
    $region29: #{tpu_custom_call.1} parent=1 // pred_fallthru
      _
    %1039 = vsyncpa [#allocation4], 1

</llo_original>
